<compile_context>
chip_gen: v6e
topology: v6e:2x2x1
jax: 0.10.0
libtpu: 0.0.40
codegen_flags: <defaults>
</compile_context>

<pallas_src>
import jax
import jax.numpy as jnp
from jax.experimental import pallas as pl
from jax.experimental.pallas import tpu as pltpu

EPS = 1e-5


def adain_kernel(x_ref, style_ref, w2t_ref, b2_ref, wst_ref, bs_ref,
                 wsht_ref, bsh_ref, out_ref):
    """Fused AdaIN for one sample.

    x_ref:     (1, C, H*W)  activations (channels on sublanes, pixels on lanes)
    style_ref: (1, 1, S)    style vector
    w2t_ref:   (S, S)       liner2.weight.T        b2_ref:  (1, S)
    wst_ref:   (S, C)       style_scale.weight.T   bs_ref:  (1, C)
    wsht_ref:  (S, C)       style_shift.weight.T   bsh_ref: (1, C)
    out_ref:   (1, C, H*W)
    """
    x = x_ref[0].astype(jnp.float32)          # (C, HW)
    sty = style_ref[0]                         # (1, S)

    # Style MLP (tiny matmuls; f32 accumulation, operands kept in input dtype).
    s = jnp.dot(sty, w2t_ref[...], preferred_element_type=jnp.float32) \
        + b2_ref[...]                                                     # (1, S)
    scale = jnp.dot(s, wst_ref[...], preferred_element_type=jnp.float32) \
        + bs_ref[...]                                                     # (1, C)
    shift = jnp.dot(s, wsht_ref[...], preferred_element_type=jnp.float32) \
        + bsh_ref[...]                                                    # (1, C)

    # InstanceNorm2d: per-channel mean / biased variance over the H*W lanes.
    mean = jnp.mean(x, axis=1, keepdims=True)                 # (C, 1)
    cen = x - mean
    var = jnp.mean(cen * cen, axis=1, keepdims=True)          # (C, 1)
    inv = jax.lax.rsqrt(var + EPS)                            # (C, 1)

    # Fold 1/std into the style scale: out = (scale*inv)*(x - mean) + shift.
    scale_c = jnp.transpose(scale) * inv                      # (C, 1)
    shift_c = jnp.transpose(shift)                            # (C, 1)
    out_ref[0] = (scale_c * cen + shift_c).astype(out_ref.dtype)


@jax.jit
def adain(x, style, w2, b2, ws, bs, wsh, bsh):
    """AdaIN forward.

    x:     (N, C, H, W)      style: (N, S)
    w2:    (S, S)  b2:  (S,)   -- liner2      (PyTorch (out, in) layout)
    ws:    (C, S)  bs:  (C,)   -- style_scale
    wsh:   (C, S)  bsh: (C,)   -- style_shift
    """
    N, C, H, W = x.shape
    S = style.shape[1]
    HW = H * W

    x2 = x.reshape(N, C, HW)           # free reshape, lane axis = H*W
    style3 = style.reshape(N, 1, S)
    w2t = jnp.transpose(w2)            # (S, S)
    wst = jnp.transpose(ws)            # (S, C)
    wsht = jnp.transpose(wsh)          # (S, C)
    b2r = b2.reshape(1, S)
    bsr = bs.reshape(1, C)
    bshr = bsh.reshape(1, C)

    out = pl.pallas_call(
        adain_kernel,
        out_shape=jax.ShapeDtypeStruct((N, C, HW), x.dtype),
        grid_spec=pltpu.PrefetchScalarGridSpec(
            num_scalar_prefetch=0,
            grid=(N,),
            in_specs=[
                pl.BlockSpec((1, C, HW), lambda n: (n, 0, 0)),   # x
                pl.BlockSpec((1, 1, S), lambda n: (n, 0, 0)),    # style
                pl.BlockSpec((S, S), lambda n: (0, 0)),          # liner2 W^T
                pl.BlockSpec((1, S), lambda n: (0, 0)),          # liner2 b
                pl.BlockSpec((S, C), lambda n: (0, 0)),          # scale W^T
                pl.BlockSpec((1, C), lambda n: (0, 0)),          # scale b
                pl.BlockSpec((S, C), lambda n: (0, 0)),          # shift W^T
                pl.BlockSpec((1, C), lambda n: (0, 0)),          # shift b
            ],
            out_specs=pl.BlockSpec((1, C, HW), lambda n: (n, 0, 0)),
        ),
        compiler_params=pltpu.CompilerParams(
            dimension_semantics=("parallel",)),
    )(x2, style3, w2t, b2r, wst, bsr, wsht, bshr)

    return out.reshape(N, C, H, W)


def _reference(x, style, w2, b2, ws, bs, wsh, bsh):
    """Pure-JAX reference of the same forward pass (for correctness check)."""
    m = jnp.mean(x, axis=(2, 3), keepdims=True)
    v = jnp.mean((x - m) ** 2, axis=(2, 3), keepdims=True)
    normalized = (x - m) * jax.lax.rsqrt(v + EPS)
    s = style @ w2.T + b2
    scale = (s @ ws.T + bs)[:, :, None, None]
    shift = (s @ wsh.T + bsh)[:, :, None, None]
    return scale * normalized + shift


if __name__ == "__main__":
    N, C, H, W, S = 2, 4, 16, 16, 8
    key = jax.random.PRNGKey(0)
    k = jax.random.split(key, 8)

    x = jax.random.normal(k[0], (N, C, H, W), dtype=jnp.float32)
    style = jax.random.normal(k[1], (N, S), dtype=jnp.float32)
    # PyTorch-layout (out_features, in_features) weights; deterministic init.
    w2 = 0.3 * jax.random.normal(k[2], (S, S), dtype=jnp.float32)
    b2 = 0.1 * jax.random.normal(k[3], (S,), dtype=jnp.float32)
    ws = 0.3 * jax.random.normal(k[4], (C, S), dtype=jnp.float32)
    bs = 0.1 * jax.random.normal(k[5], (C,), dtype=jnp.float32)
    wsh = 0.3 * jax.random.normal(k[6], (C, S), dtype=jnp.float32)
    bsh = 0.1 * jax.random.normal(k[7], (C,), dtype=jnp.float32)

    out = adain(x, style, w2, b2, ws, bs, wsh, bsh)
    out = jax.block_until_ready(out)

    ref = _reference(x, style, w2, b2, ws, bs, wsh, bsh)
    assert out.shape == (N, C, H, W)
    assert jnp.allclose(out, ref, atol=1e-4, rtol=1e-4)

    print("KERNEL_OK")
</pallas_src>

<mosaic_0001>
module attributes {stable_mosaic.version = 11 : i64} {
  func.func @adain_kernel(%arg0: i32, %arg1: memref<1x4x256xf32, #tpu.memory_space<vmem>>, %arg2: memref<1x1x8xf32, #tpu.memory_space<vmem>>, %arg3: memref<8x8xf32, #tpu.memory_space<vmem>>, %arg4: memref<1x8xf32, #tpu.memory_space<vmem>>, %arg5: memref<8x4xf32, #tpu.memory_space<vmem>>, %arg6: memref<1x4xf32, #tpu.memory_space<vmem>>, %arg7: memref<8x4xf32, #tpu.memory_space<vmem>>, %arg8: memref<1x4xf32, #tpu.memory_space<vmem>>, %arg9: memref<1x4x256xf32, #tpu.memory_space<vmem>>) attributes {dimension_semantics = [#tpu.dimension_semantics<parallel>], iteration_bounds = array<i64: 2>, scalar_prefetch = 0 : i64, scratch_operands = 0 : i64, tpu.core_type = #tpu.core_type<tc>, window_params = [{transform_indices = @transform_0, window_bounds = array<i64: 1, 4, 256>}, {transform_indices = @transform_1, window_bounds = array<i64: 1, 1, 8>}, {pipeline_mode = #tpu.pipeline_mode<synchronous>, transform_indices = @transform_2, window_bounds = array<i64: 8, 8>}, {pipeline_mode = #tpu.pipeline_mode<synchronous>, transform_indices = @transform_3, window_bounds = array<i64: 1, 8>}, {pipeline_mode = #tpu.pipeline_mode<synchronous>, transform_indices = @transform_4, window_bounds = array<i64: 8, 4>}, {pipeline_mode = #tpu.pipeline_mode<synchronous>, transform_indices = @transform_5, window_bounds = array<i64: 1, 4>}, {pipeline_mode = #tpu.pipeline_mode<synchronous>, transform_indices = @transform_6, window_bounds = array<i64: 8, 4>}, {pipeline_mode = #tpu.pipeline_mode<synchronous>, transform_indices = @transform_7, window_bounds = array<i64: 1, 4>}, {transform_indices = @transform_8, window_bounds = array<i64: 1, 4, 256>}]} {
    %c0 = arith.constant 0 : index
    %c0_0 = arith.constant 0 : index
    %c0_1 = arith.constant 0 : index
    %0 = vector.load %arg1[%c0, %c0_0, %c0_1] : memref<1x4x256xf32, #tpu.memory_space<vmem>>, vector<1x4x256xf32>
    %1 = vector.shape_cast %0 : vector<1x4x256xf32> to vector<4x256xf32>
    %c0_2 = arith.constant 0 : index
    %c0_3 = arith.constant 0 : index
    %c0_4 = arith.constant 0 : index
    %2 = vector.load %arg2[%c0_2, %c0_3, %c0_4] : memref<1x1x8xf32, #tpu.memory_space<vmem>>, vector<1x1x8xf32>
    %3 = vector.shape_cast %2 : vector<1x1x8xf32> to vector<1x8xf32>
    %c0_5 = arith.constant 0 : index
    %c0_6 = arith.constant 0 : index
    %4 = vector.load %arg3[%c0_5, %c0_6] : memref<8x8xf32, #tpu.memory_space<vmem>>, vector<8x8xf32>
    %cst = arith.constant dense<0.000000e+00> : vector<1x8xf32>
    %5 = tpu.matmul %3, %4, %cst {dimension_numbers = #tpu.dot_dimension_numbers<[1], [0], [0], [1], [0, 0, 1, 1], [], []>} : vector<1x8xf32>, vector<8x8xf32>, vector<1x8xf32> -> vector<1x8xf32>
    %c0_7 = arith.constant 0 : index
    %c0_8 = arith.constant 0 : index
    %6 = vector.load %arg4[%c0_7, %c0_8] : memref<1x8xf32, #tpu.memory_space<vmem>>, vector<1x8xf32>
    %7 = arith.addf %5, %6 : vector<1x8xf32>
    %c0_9 = arith.constant 0 : index
    %c0_10 = arith.constant 0 : index
    %8 = vector.load %arg5[%c0_9, %c0_10] : memref<8x4xf32, #tpu.memory_space<vmem>>, vector<8x4xf32>
    %cst_11 = arith.constant dense<0.000000e+00> : vector<1x4xf32>
    %9 = tpu.matmul %7, %8, %cst_11 {dimension_numbers = #tpu.dot_dimension_numbers<[1], [0], [0], [1], [0, 0, 1, 1], [], []>} : vector<1x8xf32>, vector<8x4xf32>, vector<1x4xf32> -> vector<1x4xf32>
    %c0_12 = arith.constant 0 : index
    %c0_13 = arith.constant 0 : index
    %10 = vector.load %arg6[%c0_12, %c0_13] : memref<1x4xf32, #tpu.memory_space<vmem>>, vector<1x4xf32>
    %11 = arith.addf %9, %10 : vector<1x4xf32>
    %c0_14 = arith.constant 0 : index
    %c0_15 = arith.constant 0 : index
    %12 = vector.load %arg7[%c0_14, %c0_15] : memref<8x4xf32, #tpu.memory_space<vmem>>, vector<8x4xf32>
    %cst_16 = arith.constant dense<0.000000e+00> : vector<1x4xf32>
    %13 = tpu.matmul %7, %12, %cst_16 {dimension_numbers = #tpu.dot_dimension_numbers<[1], [0], [0], [1], [0, 0, 1, 1], [], []>} : vector<1x8xf32>, vector<8x4xf32>, vector<1x4xf32> -> vector<1x4xf32>
    %c0_17 = arith.constant 0 : index
    %c0_18 = arith.constant 0 : index
    %14 = vector.load %arg8[%c0_17, %c0_18] : memref<1x4xf32, #tpu.memory_space<vmem>>, vector<1x4xf32>
    %15 = arith.addf %13, %14 : vector<1x4xf32>
    %cst_19 = arith.constant dense<0.000000e+00> : vector<4xf32>
    %16 = vector.multi_reduction <add>, %1, %cst_19 [1] : vector<4x256xf32> to vector<4xf32>
    %17 = vector.shape_cast %16 : vector<4xf32> to vector<4x1xf32>
    %cst_20 = arith.constant 2.560000e+02 : f32
    %18 = vector.broadcast %cst_20 : f32 to vector<4x1xf32>
    %19 = arith.divf %17, %18 : vector<4x1xf32>
    %20 = vector.broadcast %19 : vector<4x1xf32> to vector<4x256xf32>
    %21 = arith.subf %1, %20 : vector<4x256xf32>
    %22 = arith.mulf %21, %21 : vector<4x256xf32>
    %cst_21 = arith.constant dense<0.000000e+00> : vector<4xf32>
    %23 = vector.multi_reduction <add>, %22, %cst_21 [1] : vector<4x256xf32> to vector<4xf32>
    %24 = vector.shape_cast %23 : vector<4xf32> to vector<4x1xf32>
    %cst_22 = arith.constant 2.560000e+02 : f32
    %25 = vector.broadcast %cst_22 : f32 to vector<4x1xf32>
    %26 = arith.divf %24, %25 : vector<4x1xf32>
    %cst_23 = arith.constant 9.99999974E-6 : f32
    %27 = vector.broadcast %cst_23 : f32 to vector<4x1xf32>
    %28 = arith.addf %26, %27 : vector<4x1xf32>
    %29 = math.rsqrt %28 : vector<4x1xf32>
    %30 = tpu.transpose %11, [1, 0] : vector<1x4xf32> -> vector<4x1xf32>
    %31 = arith.mulf %30, %29 : vector<4x1xf32>
    %32 = tpu.transpose %15, [1, 0] : vector<1x4xf32> -> vector<4x1xf32>
    %33 = vector.broadcast %31 : vector<4x1xf32> to vector<4x256xf32>
    %34 = arith.mulf %33, %21 : vector<4x256xf32>
    %35 = vector.broadcast %32 : vector<4x1xf32> to vector<4x256xf32>
    %36 = arith.addf %34, %35 : vector<4x256xf32>
    %c0_24 = arith.constant 0 : index
    %c0_25 = arith.constant 0 : index
    %c0_26 = arith.constant 0 : index
    %37 = vector.load %arg9[%c0_24, %c0_25, %c0_26] : memref<1x4x256xf32, #tpu.memory_space<vmem>>, vector<1x4x256xf32>
    %38 = vector.shape_cast %37 : vector<1x4x256xf32> to vector<4x256xf32>
    %39 = vector.shape_cast %36 : vector<4x256xf32> to vector<1x4x256xf32>
    tpu.vector_store %arg9[%c0_24, %c0_25, %c0_26], %39 {strides = array<i32>} : memref<1x4x256xf32, #tpu.memory_space<vmem>>, vector<1x4x256xf32>,
    return
  }
  func.func @transform_0(%arg0: i32) -> (i32, i32, i32) {
    %c0_i32 = arith.constant 0 : i32
    %c0_i32_0 = arith.constant 0 : i32
    %c0_i32_1 = arith.constant 0 : i32
    return %arg0, %c0_i32, %c0_i32_0 : i32, i32, i32
  }
  func.func @transform_1(%arg0: i32) -> (i32, i32, i32) {
    %c0_i32 = arith.constant 0 : i32
    %c0_i32_0 = arith.constant 0 : i32
    %c0_i32_1 = arith.constant 0 : i32
    return %arg0, %c0_i32, %c0_i32_0 : i32, i32, i32
  }
  func.func @transform_2(%arg0: i32) -> (i32, i32) {
    %c0_i32 = arith.constant 0 : i32
    %c0_i32_0 = arith.constant 0 : i32
    %c0_i32_1 = arith.constant 0 : i32
    return %c0_i32, %c0_i32_0 : i32, i32
  }
  func.func @transform_3(%arg0: i32) -> (i32, i32) {
    %c0_i32 = arith.constant 0 : i32
    %c0_i32_0 = arith.constant 0 : i32
    %c0_i32_1 = arith.constant 0 : i32
    return %c0_i32, %c0_i32_0 : i32, i32
  }
  func.func @transform_4(%arg0: i32) -> (i32, i32) {
    %c0_i32 = arith.constant 0 : i32
    %c0_i32_0 = arith.constant 0 : i32
    %c0_i32_1 = arith.constant 0 : i32
    return %c0_i32, %c0_i32_0 : i32, i32
  }
  func.func @transform_5(%arg0: i32) -> (i32, i32) {
    %c0_i32 = arith.constant 0 : i32
    %c0_i32_0 = arith.constant 0 : i32
    %c0_i32_1 = arith.constant 0 : i32
    return %c0_i32, %c0_i32_0 : i32, i32
  }
  func.func @transform_6(%arg0: i32) -> (i32, i32) {
    %c0_i32 = arith.constant 0 : i32
    %c0_i32_0 = arith.constant 0 : i32
    %c0_i32_1 = arith.constant 0 : i32
    return %c0_i32, %c0_i32_0 : i32, i32
  }
  func.func @transform_7(%arg0: i32) -> (i32, i32) {
    %c0_i32 = arith.constant 0 : i32
    %c0_i32_0 = arith.constant 0 : i32
    %c0_i32_1 = arith.constant 0 : i32
    return %c0_i32, %c0_i32_0 : i32, i32
  }
  func.func @transform_8(%arg0: i32) -> (i32, i32, i32) {
    %c0_i32 = arith.constant 0 : i32
    %c0_i32_0 = arith.constant 0 : i32
    %c0_i32_1 = arith.constant 0 : i32
    return %arg0, %c0_i32, %c0_i32_0 : i32, i32, i32
  }
}

</mosaic_0001>

<llo_original>
// kernel: adain.1
$region0: #{adain.1}
  #allocation0 [shape = 'u32[]', space=smem, size = 0x4, offset = 0x4, fixed_abs, tag = 'smem constant byte address 0x4 - core index']
  #allocation1 [shape = 'u32[144,128]{1,0:T(1,128)}', space=vmem, size = 0x12000, scoped, tag = 'internal scratch']
  %s0 = inlined_call_operand.vmem [shape: f32[2,4,256], index: 0, kind: input, shape index: {}]
  %s1 = inlined_call_operand.vmem [shape: f32[2,1,8], index: 1, kind: input, shape index: {}]
  %s2 = inlined_call_operand.vmem [shape: f32[8,8], index: 2, kind: input, shape index: {}]
  %s3 = inlined_call_operand.vmem [shape: f32[1,8], index: 3, kind: input, shape index: {}]
  %s4 = inlined_call_operand.vmem [shape: f32[8,4], index: 4, kind: input, shape index: {}]
  %s5 = inlined_call_operand.vmem [shape: f32[1,4], index: 5, kind: input, shape index: {}]
  %s6 = inlined_call_operand.vmem [shape: f32[8,4], index: 6, kind: input, shape index: {}]
  %s7 = inlined_call_operand.vmem [shape: f32[1,4], index: 7, kind: input, shape index: {}]
  %s8 = inlined_call_operand.vmem [shape: f32[2,4,256], index: 8, kind: output, shape index: {}]
  %s9 = sld [smem:[#allocation0]]
  $region65: #{adain.1} parent=0
    _
  %s11 = ssub.s32 1, %s9
  %s12 = scalar_select 0, %s11, %s9
  loop: start=0, step=1, limit=4
  $region2: #{adain.1} parent=0 // loop_pre_header
    _
  $region3: #{adain.1} parent=0 // loop_header
    %s14 = sphi 0, %s18
    %p15 = scmp.ge.s32.totalorder %s14, 4
    %s24 = sphi 0, %s26
    %s27 = sphi 0, %s24
    %s28 = sphi 0, %s27
    %s44 = sphi 0, %s28
    %s50 = sphi 0, %s52
    %s53 = sphi 0, %s50
    %s54 = sphi 0, %s53
    %s70 = sphi 0, %s54
    %s74 = sphi 0, %s74
    %s76 = sphi 0, %s74
    %s77 = sphi 0, %s76
    %s91 = sphi 0, %s77
    %s95 = sphi 0, %s95
    %s97 = sphi 0, %s95
    %s98 = sphi 0, %s97
    %s112 = sphi 0, %s98
    %s116 = sphi 0, %s116
    %s118 = sphi 0, %s116
    %s119 = sphi 0, %s118
    %s133 = sphi 0, %s119
    %s137 = sphi 0, %s137
    %s139 = sphi 0, %s137
    %s140 = sphi 0, %s139
    %s154 = sphi 0, %s140
    %s158 = sphi 0, %s158
    %s160 = sphi 0, %s158
    %s161 = sphi 0, %s160
    %s175 = sphi 0, %s161
    %s179 = sphi 0, %s179
    %s181 = sphi 0, %s179
    %s182 = sphi 0, %s181
    %s196 = sphi 0, %s182
    %s202 = sphi 0, %s204
    %s205 = sphi 0, %s202
    %s206 = sphi 0, %s205
    %s222 = sphi 0, %s206
  $region4: #{adain.1} parent=0 // loop_header_branch
    %17 = sbr.rel (%p15) target = $region8
  $region5: #{adain.1} parent=0 // loop_body
    %s19 = ssub.s32 %s14, 1
    %s20 = ssub.s32 %s14, 2
    %s21 = sadd.s32 %s14, 1
    %s22 = ssub.s32 %s14, %s21
    %p23 = scmp.eq.s32.totalorder %s22, 0
    %s25 = sadd.s32 %s24, 1
    %s26 = scalar_select %p23, %s24, %s25
    %p29 = pneg %p23
    %p30 = scmp.eq.s32.totalorder %s14, 1
    %p31 = por %p29, %p30
    %p32 = scmp.ne.s32.totalorder %s24, %s27
    %p33 = scmp.eq.s32.totalorder %s14, 0
    %p34 = por %p32, %p33
    %p35 = scmp.ne.s32.totalorder %s24, %s27
    %p36 = scmp.eq.s32.totalorder %s19, 1
    %p37 = por %p35, %p36
    %p38 = scmp.ne.s32.totalorder %s27, %s28
    %p39 = scmp.eq.s32.totalorder %s19, 0
    %p40 = por %p38, %p39
    %p41 = scmp.ne.s32.totalorder %s27, %s28
    %p42 = scmp.eq.s32.totalorder %s20, 1
    %p43 = por %p41, %p42
    %p45 = scmp.ne.s32.totalorder %s28, %s44
    %p46 = scmp.eq.s32.totalorder %s20, 0
    %p47 = por %p45, %p46
    %s48 = ssub.s32 %s14, %s21
    %p49 = scmp.eq.s32.totalorder %s48, 0
    %s51 = sadd.s32 %s50, 1
    %s52 = scalar_select %p49, %s50, %s51
    %p55 = pneg %p49
    %p56 = scmp.eq.s32.totalorder %s14, 1
    %p57 = por %p55, %p56
    %p58 = scmp.ne.s32.totalorder %s50, %s53
    %p59 = scmp.eq.s32.totalorder %s14, 0
    %p60 = por %p58, %p59
    %p61 = scmp.ne.s32.totalorder %s50, %s53
    %p62 = scmp.eq.s32.totalorder %s19, 1
    %p63 = por %p61, %p62
    %p64 = scmp.ne.s32.totalorder %s53, %s54
    %p65 = scmp.eq.s32.totalorder %s19, 0
    %p66 = por %p64, %p65
    %p67 = scmp.ne.s32.totalorder %s53, %s54
    %p68 = scmp.eq.s32.totalorder %s20, 1
    %p69 = por %p67, %p68
    %p71 = scmp.ne.s32.totalorder %s54, %s70
    %p72 = scmp.eq.s32.totalorder %s20, 0
    %p73 = por %p71, %p72
    %s75 = sadd.s32 %s74, 1
    %p78 = scmp.eq.s32.totalorder %s14, 1
    %p79 = scmp.ne.s32.totalorder %s74, %s76
    %p80 = scmp.eq.s32.totalorder %s14, 0
    %p81 = por %p79, %p80
    %p82 = scmp.ne.s32.totalorder %s74, %s76
    %p83 = scmp.eq.s32.totalorder %s19, 1
    %p84 = por %p82, %p83
    %p85 = scmp.ne.s32.totalorder %s76, %s77
    %p86 = scmp.eq.s32.totalorder %s19, 0
    %p87 = por %p85, %p86
    %p88 = scmp.ne.s32.totalorder %s76, %s77
    %p89 = scmp.eq.s32.totalorder %s20, 1
    %p90 = por %p88, %p89
    %p92 = scmp.ne.s32.totalorder %s77, %s91
    %p93 = scmp.eq.s32.totalorder %s20, 0
    %p94 = por %p92, %p93
    %s96 = sadd.s32 %s95, 1
    %p99 = scmp.eq.s32.totalorder %s14, 1
    %p100 = scmp.ne.s32.totalorder %s95, %s97
    %p101 = scmp.eq.s32.totalorder %s14, 0
    %p102 = por %p100, %p101
    %p103 = scmp.ne.s32.totalorder %s95, %s97
    %p104 = scmp.eq.s32.totalorder %s19, 1
    %p105 = por %p103, %p104
    %p106 = scmp.ne.s32.totalorder %s97, %s98
    %p107 = scmp.eq.s32.totalorder %s19, 0
    %p108 = por %p106, %p107
    %p109 = scmp.ne.s32.totalorder %s97, %s98
    %p110 = scmp.eq.s32.totalorder %s20, 1
    %p111 = por %p109, %p110
    %p113 = scmp.ne.s32.totalorder %s98, %s112
    %p114 = scmp.eq.s32.totalorder %s20, 0
    %p115 = por %p113, %p114
    %s117 = sadd.s32 %s116, 1
    %p120 = scmp.eq.s32.totalorder %s14, 1
    %p121 = scmp.ne.s32.totalorder %s116, %s118
    %p122 = scmp.eq.s32.totalorder %s14, 0
    %p123 = por %p121, %p122
    %p124 = scmp.ne.s32.totalorder %s116, %s118
    %p125 = scmp.eq.s32.totalorder %s19, 1
    %p126 = por %p124, %p125
    %p127 = scmp.ne.s32.totalorder %s118, %s119
    %p128 = scmp.eq.s32.totalorder %s19, 0
    %p129 = por %p127, %p128
    %p130 = scmp.ne.s32.totalorder %s118, %s119
    %p131 = scmp.eq.s32.totalorder %s20, 1
    %p132 = por %p130, %p131
    %p134 = scmp.ne.s32.totalorder %s119, %s133
    %p135 = scmp.eq.s32.totalorder %s20, 0
    %p136 = por %p134, %p135
    %s138 = sadd.s32 %s137, 1
    %p141 = scmp.eq.s32.totalorder %s14, 1
    %p142 = scmp.ne.s32.totalorder %s137, %s139
    %p143 = scmp.eq.s32.totalorder %s14, 0
    %p144 = por %p142, %p143
    %p145 = scmp.ne.s32.totalorder %s137, %s139
    %p146 = scmp.eq.s32.totalorder %s19, 1
    %p147 = por %p145, %p146
    %p148 = scmp.ne.s32.totalorder %s139, %s140
    %p149 = scmp.eq.s32.totalorder %s19, 0
    %p150 = por %p148, %p149
    %p151 = scmp.ne.s32.totalorder %s139, %s140
    %p152 = scmp.eq.s32.totalorder %s20, 1
    %p153 = por %p151, %p152
    %p155 = scmp.ne.s32.totalorder %s140, %s154
    %p156 = scmp.eq.s32.totalorder %s20, 0
    %p157 = por %p155, %p156
    %s159 = sadd.s32 %s158, 1
    %p162 = scmp.eq.s32.totalorder %s14, 1
    %p163 = scmp.ne.s32.totalorder %s158, %s160
    %p164 = scmp.eq.s32.totalorder %s14, 0
    %p165 = por %p163, %p164
    %p166 = scmp.ne.s32.totalorder %s158, %s160
    %p167 = scmp.eq.s32.totalorder %s19, 1
    %p168 = por %p166, %p167
    %p169 = scmp.ne.s32.totalorder %s160, %s161
    %p170 = scmp.eq.s32.totalorder %s19, 0
    %p171 = por %p169, %p170
    %p172 = scmp.ne.s32.totalorder %s160, %s161
    %p173 = scmp.eq.s32.totalorder %s20, 1
    %p174 = por %p172, %p173
    %p176 = scmp.ne.s32.totalorder %s161, %s175
    %p177 = scmp.eq.s32.totalorder %s20, 0
    %p178 = por %p176, %p177
    %s180 = sadd.s32 %s179, 1
    %p183 = scmp.eq.s32.totalorder %s14, 1
    %p184 = scmp.ne.s32.totalorder %s179, %s181
    %p185 = scmp.eq.s32.totalorder %s14, 0
    %p186 = por %p184, %p185
    %p187 = scmp.ne.s32.totalorder %s179, %s181
    %p188 = scmp.eq.s32.totalorder %s19, 1
    %p189 = por %p187, %p188
    %p190 = scmp.ne.s32.totalorder %s181, %s182
    %p191 = scmp.eq.s32.totalorder %s19, 0
    %p192 = por %p190, %p191
    %p193 = scmp.ne.s32.totalorder %s181, %s182
    %p194 = scmp.eq.s32.totalorder %s20, 1
    %p195 = por %p193, %p194
    %p197 = scmp.ne.s32.totalorder %s182, %s196
    %p198 = scmp.eq.s32.totalorder %s20, 0
    %p199 = por %p197, %p198
    %s200 = ssub.s32 %s14, %s21
    %p201 = scmp.eq.s32.totalorder %s200, 0
    %s203 = sadd.s32 %s202, 1
    %s204 = scalar_select %p201, %s202, %s203
    %p207 = pneg %p201
    %p208 = scmp.eq.s32.totalorder %s14, 1
    %p209 = por %p207, %p208
    %p210 = scmp.ne.s32.totalorder %s202, %s205
    %p211 = scmp.eq.s32.totalorder %s14, 0
    %p212 = por %p210, %p211
    %p213 = scmp.ne.s32.totalorder %s202, %s205
    %p214 = scmp.eq.s32.totalorder %s19, 1
    %p215 = por %p213, %p214
    %p216 = scmp.ne.s32.totalorder %s205, %s206
    %p217 = scmp.eq.s32.totalorder %s19, 0
    %p218 = por %p216, %p217
    %p219 = scmp.ne.s32.totalorder %s205, %s206
    %p220 = scmp.eq.s32.totalorder %s20, 1
    %p221 = por %p219, %p220
    %p223 = scmp.ne.s32.totalorder %s206, %s222
    %p224 = scmp.eq.s32.totalorder %s20, 0
    %p225 = por %p223, %p224
    %p226 = scmp.le.s32.totalorder 1, %s14
    %p227 = scmp.lt.s32.totalorder %s14, 3
    %p228 = pnand %p226, %p227
    %p229 = pneg %p228
    // Predicated region
    $region9: #{adain.1} parent=5 // pred_check
      _
    $region10: #{adain.1} parent=5 // pred_check_branch
      %231 = sbr.rel (%p228) target = $region12
    $region11: #{adain.1} parent=5 // pred_region
      %s232 = ssub.s32 %s14, 1
      // Predicated region
      $region13: #{adain.1} parent=11 // pred_check
        %p233 = pneg %p87
      $region14: #{adain.1} parent=11 // pred_check_branch
        %235 = sbr.rel (%p233) target = $region16
      $region15: #{adain.1} parent=11 // pred_region
        _
      $region16: #{adain.1} parent=11 // pred_fallthru
        _
      // Predicated region
      $region17: #{adain.1} parent=11 // pred_check
        %p236 = pneg %p108
      $region18: #{adain.1} parent=11 // pred_check_branch
        %238 = sbr.rel (%p236) target = $region20
      $region19: #{adain.1} parent=11 // pred_region
        _
      $region20: #{adain.1} parent=11 // pred_fallthru
        _
      // Predicated region
      $region21: #{adain.1} parent=11 // pred_check
        %p239 = pneg %p129
      $region22: #{adain.1} parent=11 // pred_check_branch
        %241 = sbr.rel (%p239) target = $region24
      $region23: #{adain.1} parent=11 // pred_region
        _
      $region24: #{adain.1} parent=11 // pred_fallthru
        _
      // Predicated region
      $region25: #{adain.1} parent=11 // pred_check
        %p242 = pneg %p150
      $region26: #{adain.1} parent=11 // pred_check_branch
        %244 = sbr.rel (%p242) target = $region28
      $region27: #{adain.1} parent=11 // pred_region
        _
      $region28: #{adain.1} parent=11 // pred_fallthru
        _
      // Predicated region
      $region29: #{adain.1} parent=11 // pred_check
        %p245 = pneg %p171
      $region30: #{adain.1} parent=11 // pred_check_branch
        %247 = sbr.rel (%p245) target = $region32
      $region31: #{adain.1} parent=11 // pred_region
        _
      $region32: #{adain.1} parent=11 // pred_fallthru
        _
      // Predicated region
      $region33: #{adain.1} parent=11 // pred_check
        %p248 = pneg %p192
      $region34: #{adain.1} parent=11 // pred_check_branch
        %250 = sbr.rel (%p248) target = $region36
      $region35: #{adain.1} parent=11 // pred_region
        _
      $region36: #{adain.1} parent=11 // pred_fallthru
        _
    $region12: #{adain.1} parent=5 // pred_fallthru
      _
    %p251 = scmp.lt.s32.totalorder %s14, 2
    // Predicated region
    $region37: #{adain.1} parent=5 // pred_check
      %p252 = pneg %p251
    $region38: #{adain.1} parent=5 // pred_check_branch
      %254 = sbr.rel (%p252) target = $region40
    $region39: #{adain.1} parent=5 // pred_region
      // Predicated region
      $region41: #{adain.1} parent=39 // pred_check
        %p255 = pneg %p34
      $region42: #{adain.1} parent=39 // pred_check_branch
        %257 = sbr.rel (%p255) target = $region44
      $region43: #{adain.1} parent=39 // pred_region
        %p258 = scmp.lt.s32.totalorder %s14, 1
        %s259 = scalar_select %p258, %s14, 1
        %s260 = smul.addr %s259, 2
        %s261 = smul.addr %s260, 4
        %s262 = scalar_lea.vmem %s0, %s261
      $region44: #{adain.1} parent=39 // pred_fallthru
        _
      // Predicated region
      $region45: #{adain.1} parent=39 // pred_check
        %p263 = pneg %p60
      $region46: #{adain.1} parent=39 // pred_check_branch
        %265 = sbr.rel (%p263) target = $region48
      $region47: #{adain.1} parent=39 // pred_region
        %p266 = scmp.lt.s32.totalorder %s14, 1
        %s267 = scalar_select %p266, %s14, 1
        %s268 = scalar_lea.vmem %s1, %s267
      $region48: #{adain.1} parent=39 // pred_fallthru
        _
    $region40: #{adain.1} parent=5 // pred_fallthru
      _
    %p269 = scmp.le.s32.totalorder 1, %s14
    %p270 = scmp.lt.s32.totalorder %s14, 3
    %p271 = pnand %p269, %p270
    %p272 = pneg %p271
    // Predicated region
    $region49: #{adain.1} parent=5 // pred_check
      _
    $region50: #{adain.1} parent=5 // pred_check_branch
      %274 = sbr.rel (%p271) target = $region52
    $region51: #{adain.1} parent=5 // pred_region
      %s275 = ssub.s32 %s14, 1
      %p276 = scmp.lt.s32.totalorder %s19, 1
      %s277 = scalar_select %p276, %s19, 1
      %s278 = smul.addr %s277, 2
      %s279 = smul.addr %s278, 4
      %s280 = scalar_lea.vmem %s0, %s279
      %p281 = pneg %p40
      %p282 = pneg %p37
      %p283 = scmp.lt.s32.totalorder %s19, 1
      %s284 = scalar_select %p283, %s19, 1
      %s285 = scalar_lea.vmem %s1, %s284
      %p286 = pneg %p66
      %p287 = pneg %p63
      %p288 = pneg %p87
      %p289 = pneg %p84
      %p290 = pneg %p108
      %p291 = pneg %p105
      %p292 = pneg %p129
      %p293 = pneg %p126
      %p294 = pneg %p150
      %p295 = pneg %p147
      %p296 = pneg %p171
      %p297 = pneg %p168
      %p298 = pneg %p192
      %p299 = pneg %p189
      %p300 = pneg %p218
      %p301 = pneg %p215
      %p302 = scmp.lt.s32.totalorder %s19, 1
      %s303 = scalar_select %p302, %s19, 1
      %s304 = smul.addr %s303, 2
      %s305 = smul.addr %s304, 4
      %s306 = scalar_lea.vmem %s8, %s305
      %p307 = scmp.lt.s32.totalorder %s19, 1
      %s308 = scalar_select %p307, %s19, 1
      %s309 = smul.addr %s308, 2
      %s310 = smul.addr %s309, 4
      %s311 = scalar_lea.vmem %s0, %s310
      %p312 = scmp.lt.s32.totalorder %s19, 1
      %s313 = scalar_select %p312, %s19, 1
      %s314 = scalar_lea.vmem %s1, %s313
      %p315 = scmp.lt.s32.totalorder %s19, 1
      %s316 = scalar_select %p315, %s19, 1
      %s317 = smul.addr %s316, 2
      %s318 = smul.addr %s317, 4
      %s319 = scalar_lea.vmem %s8, %s318
      %v320 = vld [vmem:[%s311] sm:$0xff]
      %v321 = vld [vmem:[%s314] sm:$0x1]
      %v322 = vld [vmem:[%s2] sm:$0xff]
      %v323 = vld [vmem:[%s3] sm:$0x1]
      %vm324 = vcmask 64512
      %v326 = vsel %vm324, %v321, 0
      %328 = vmatprep.subr.mxu0 0.0
      %329 = vmatpush1.msra.mxu0 0.0
      %330 = vmatprep.subr.mxu0 0.0
      %331 = vmatpush1.msra.mxu0 0.0
      %332 = vmatprep.subr.mxu0 0.0
      %333 = vmatpush1.msra.mxu0 0.0
      %334 = vmatprep.subr.mxu0 0.0
      %335 = vmatpush1.msra.mxu0 0.0
      %336 = vmatprep.subr.mxu0 0.0
      %337 = vmatpush1.msra.mxu0 0.0
      %338 = vmatprep.subr.mxu0 0.0
      %339 = vmatpush1.msra.mxu0 0.0
      %340 = vmatprep.subr.mxu0 0.0
      %341 = vmatpush1.msra.mxu0 0.0
      %342 = vmatprep.subr.mxu0 0.0
      %343 = vmatpush1.msra.mxu0 0.0
      %344 = vmatprep.subr.mxu0 0.0
      %345 = vmatpush1.msra.mxu0 0.0
      %346 = vmatprep.subr.mxu0 0.0
      %347 = vmatpush1.msra.mxu0 0.0
      %348 = vmatprep.subr.mxu0 0.0
      %349 = vmatpush1.msra.mxu0 0.0
      %350 = vmatprep.subr.mxu0 0.0
      %351 = vmatpush1.msra.mxu0 0.0
      %352 = vmatprep.subr.mxu0 0.0
      %353 = vmatpush1.msra.mxu0 0.0
      %354 = vmatprep.subr.mxu0 0.0
      %355 = vmatpush1.msra.mxu0 0.0
      %356 = vmatprep.subr.mxu0 0.0
      %357 = vmatpush1.msra.mxu0 0.0
      %358 = vmatprep.subr.mxu0 0.0
      %359 = vmatpush1.msra.mxu0 %v322
      %360 = vmatprep.subr.mxu0 0.0
      %361 = vmatpush2.msra.mxu0 0.0
      %362 = vmatprep.subr.mxu0 0.0
      %363 = vmatpush2.msra.mxu0 0.0
      %364 = vmatprep.subr.mxu0 0.0
      %365 = vmatpush2.msra.mxu0 0.0
      %366 = vmatprep.subr.mxu0 0.0
      %367 = vmatpush2.msra.mxu0 0.0
      %368 = vmatprep.subr.mxu0 0.0
      %369 = vmatpush2.msra.mxu0 0.0
      %370 = vmatprep.subr.mxu0 0.0
      %371 = vmatpush2.msra.mxu0 0.0
      %372 = vmatprep.subr.mxu0 0.0
      %373 = vmatpush2.msra.mxu0 0.0
      %374 = vmatprep.subr.mxu0 0.0
      %375 = vmatpush2.msra.mxu0 0.0
      %376 = vmatprep.subr.mxu0 0.0
      %377 = vmatpush2.msra.mxu0 0.0
      %378 = vmatprep.subr.mxu0 0.0
      %379 = vmatpush2.msra.mxu0 0.0
      %380 = vmatprep.subr.mxu0 0.0
      %381 = vmatpush2.msra.mxu0 0.0
      %382 = vmatprep.subr.mxu0 0.0
      %383 = vmatpush2.msra.mxu0 0.0
      %384 = vmatprep.subr.mxu0 0.0
      %385 = vmatpush2.msra.mxu0 0.0
      %386 = vmatprep.subr.mxu0 0.0
      %387 = vmatpush2.msra.mxu0 0.0
      %388 = vmatprep.subr.mxu0 0.0
      %389 = vmatpush2.msra.mxu0 0.0
      %390 = vmatprep.subr.mxu0 0.0
      %391 = vmatpush2.msra.mxu0 0.0
      %392 = vmatprep.mubr.f32.mxu0 0.0
      %393 = vmatmul.mubr.f32.gmra.mxu0 %v326
      %v394 = vpop.f32.mrf.mxu0
      %v395 = vadd.f32 %v323, %v394
      %v396 = vpop.f32.mrf.mxu0
      %397 = vdwg.mxu0
      %v398 = vld [vmem:[%s4] sm:$0xff]
      %v399 = vld [vmem:[%s5] sm:$0x1]
      %v401 = vsel %vm324, %v395, 0
      %403 = vmatprep.subr.mxu0 0.0
      %404 = vmatpush1.msra.mxu0 0.0
      %405 = vmatprep.subr.mxu0 0.0
      %406 = vmatpush1.msra.mxu0 0.0
      %407 = vmatprep.subr.mxu0 0.0
      %408 = vmatpush1.msra.mxu0 0.0
      %409 = vmatprep.subr.mxu0 0.0
      %410 = vmatpush1.msra.mxu0 0.0
      %411 = vmatprep.subr.mxu0 0.0
      %412 = vmatpush1.msra.mxu0 0.0
      %413 = vmatprep.subr.mxu0 0.0
      %414 = vmatpush1.msra.mxu0 0.0
      %415 = vmatprep.subr.mxu0 0.0
      %416 = vmatpush1.msra.mxu0 0.0
      %417 = vmatprep.subr.mxu0 0.0
      %418 = vmatpush1.msra.mxu0 0.0
      %419 = vmatprep.subr.mxu0 0.0
      %420 = vmatpush1.msra.mxu0 0.0
      %421 = vmatprep.subr.mxu0 0.0
      %422 = vmatpush1.msra.mxu0 0.0
      %423 = vmatprep.subr.mxu0 0.0
      %424 = vmatpush1.msra.mxu0 0.0
      %425 = vmatprep.subr.mxu0 0.0
      %426 = vmatpush1.msra.mxu0 0.0
      %427 = vmatprep.subr.mxu0 0.0
      %428 = vmatpush1.msra.mxu0 0.0
      %429 = vmatprep.subr.mxu0 0.0
      %430 = vmatpush1.msra.mxu0 0.0
      %431 = vmatprep.subr.mxu0 0.0
      %432 = vmatpush1.msra.mxu0 0.0
      %433 = vmatprep.subr.mxu0 0.0
      %434 = vmatpush1.msra.mxu0 %v398
      %435 = vmatprep.subr.mxu0 0.0
      %436 = vmatpush2.msra.mxu0 0.0
      %437 = vmatprep.subr.mxu0 0.0
      %438 = vmatpush2.msra.mxu0 0.0
      %439 = vmatprep.subr.mxu0 0.0
      %440 = vmatpush2.msra.mxu0 0.0
      %441 = vmatprep.subr.mxu0 0.0
      %442 = vmatpush2.msra.mxu0 0.0
      %443 = vmatprep.subr.mxu0 0.0
      %444 = vmatpush2.msra.mxu0 0.0
      %445 = vmatprep.subr.mxu0 0.0
      %446 = vmatpush2.msra.mxu0 0.0
      %447 = vmatprep.subr.mxu0 0.0
      %448 = vmatpush2.msra.mxu0 0.0
      %449 = vmatprep.subr.mxu0 0.0
      %450 = vmatpush2.msra.mxu0 0.0
      %451 = vmatprep.subr.mxu0 0.0
      %452 = vmatpush2.msra.mxu0 0.0
      %453 = vmatprep.subr.mxu0 0.0
      %454 = vmatpush2.msra.mxu0 0.0
      %455 = vmatprep.subr.mxu0 0.0
      %456 = vmatpush2.msra.mxu0 0.0
      %457 = vmatprep.subr.mxu0 0.0
      %458 = vmatpush2.msra.mxu0 0.0
      %459 = vmatprep.subr.mxu0 0.0
      %460 = vmatpush2.msra.mxu0 0.0
      %461 = vmatprep.subr.mxu0 0.0
      %462 = vmatpush2.msra.mxu0 0.0
      %463 = vmatprep.subr.mxu0 0.0
      %464 = vmatpush2.msra.mxu0 0.0
      %465 = vmatprep.subr.mxu0 0.0
      %466 = vmatpush2.msra.mxu0 0.0
      %467 = vmatprep.mubr.f32.mxu0 0.0
      %468 = vmatmul.mubr.f32.gmra.mxu0 %v401
      %v469 = vpop.f32.mrf.mxu0
      %v470 = vadd.f32 %v399, %v469
      %v471 = vpop.f32.mrf.mxu0
      %472 = vdwg.mxu0
      %v473 = vld [vmem:[%s6] sm:$0xff]
      %v474 = vld [vmem:[%s7] sm:$0x1]
      %475 = vmatprep.subr.mxu0 0.0
      %476 = vmatpush1.msra.mxu0 0.0
      %477 = vmatprep.subr.mxu0 0.0
      %478 = vmatpush1.msra.mxu0 0.0
      %479 = vmatprep.subr.mxu0 0.0
      %480 = vmatpush1.msra.mxu0 0.0
      %481 = vmatprep.subr.mxu0 0.0
      %482 = vmatpush1.msra.mxu0 0.0
      %483 = vmatprep.subr.mxu0 0.0
      %484 = vmatpush1.msra.mxu0 0.0
      %485 = vmatprep.subr.mxu0 0.0
      %486 = vmatpush1.msra.mxu0 0.0
      %487 = vmatprep.subr.mxu0 0.0
      %488 = vmatpush1.msra.mxu0 0.0
      %489 = vmatprep.subr.mxu0 0.0
      %490 = vmatpush1.msra.mxu0 0.0
      %491 = vmatprep.subr.mxu0 0.0
      %492 = vmatpush1.msra.mxu0 0.0
      %493 = vmatprep.subr.mxu0 0.0
      %494 = vmatpush1.msra.mxu0 0.0
      %495 = vmatprep.subr.mxu0 0.0
      %496 = vmatpush1.msra.mxu0 0.0
      %497 = vmatprep.subr.mxu0 0.0
      %498 = vmatpush1.msra.mxu0 0.0
      %499 = vmatprep.subr.mxu0 0.0
      %500 = vmatpush1.msra.mxu0 0.0
      %501 = vmatprep.subr.mxu0 0.0
      %502 = vmatpush1.msra.mxu0 0.0
      %503 = vmatprep.subr.mxu0 0.0
      %504 = vmatpush1.msra.mxu0 0.0
      %505 = vmatprep.subr.mxu0 0.0
      %506 = vmatpush1.msra.mxu0 %v473
      %507 = vmatprep.subr.mxu0 0.0
      %508 = vmatpush2.msra.mxu0 0.0
      %509 = vmatprep.subr.mxu0 0.0
      %510 = vmatpush2.msra.mxu0 0.0
      %511 = vmatprep.subr.mxu0 0.0
      %512 = vmatpush2.msra.mxu0 0.0
      %513 = vmatprep.subr.mxu0 0.0
      %514 = vmatpush2.msra.mxu0 0.0
      %515 = vmatprep.subr.mxu0 0.0
      %516 = vmatpush2.msra.mxu0 0.0
      %517 = vmatprep.subr.mxu0 0.0
      %518 = vmatpush2.msra.mxu0 0.0
      %519 = vmatprep.subr.mxu0 0.0
      %520 = vmatpush2.msra.mxu0 0.0
      %521 = vmatprep.subr.mxu0 0.0
      %522 = vmatpush2.msra.mxu0 0.0
      %523 = vmatprep.subr.mxu0 0.0
      %524 = vmatpush2.msra.mxu0 0.0
      %525 = vmatprep.subr.mxu0 0.0
      %526 = vmatpush2.msra.mxu0 0.0
      %527 = vmatprep.subr.mxu0 0.0
      %528 = vmatpush2.msra.mxu0 0.0
      %529 = vmatprep.subr.mxu0 0.0
      %530 = vmatpush2.msra.mxu0 0.0
      %531 = vmatprep.subr.mxu0 0.0
      %532 = vmatpush2.msra.mxu0 0.0
      %533 = vmatprep.subr.mxu0 0.0
      %534 = vmatpush2.msra.mxu0 0.0
      %535 = vmatprep.subr.mxu0 0.0
      %536 = vmatpush2.msra.mxu0 0.0
      %537 = vmatprep.subr.mxu0 0.0
      %538 = vmatpush2.msra.mxu0 0.0
      %539 = vmatprep.mubr.f32.mxu0 0.0
      %540 = vmatmul.mubr.f32.gmra.mxu0 %v401
      %v541 = vpop.f32.mrf.mxu0
      %v542 = vadd.f32 %v474, %v541
      %v543 = vpop.f32.mrf.mxu0
      %544 = vdwg.mxu0
      %v546 = vcombine.high %v320, %v320
      %vm548 = vcmask 1043456
      %v549 = vsel %vm548, %v320, 0.0
      %v550 = vsel %vm548, %v546, 0.0
      %v551 = vadd.f32 %v549, %v550
      %552 = vadd.xlane.f32.xlu0 %v551
      %v553 = vpop.xlane.xlu0 %552
      %v554 = vrcp.pop 256.0
      %v555 = vmul.f32 %v553, %v554
      %v558 = vunpack.c.l.s4 839922192
      %v559 = vunpack.c.0.s8 %v558
      %v560 = vlaneseq
      %v561 = vshrl.u32 %v560, 7
      %v562 = vsub.s32 %v559, %v561
      %v563 = vrot.slane %v555, %v562
      %v565 = vsub.f32 %v320, %v563
      %v566 = vmul.f32 %v565, %v565
      %v568 = vcombine.high %v566, %v566
      %v570 = vsel %vm548, %v566, 0.0
      %v571 = vsel %vm548, %v568, 0.0
      %v572 = vadd.f32 %v570, %v571
      %573 = vadd.xlane.f32.xlu0 %v572
      %v574 = vpop.xlane.xlu0 %573
      %v575 = vmul.f32 %v574, %v554
      %v576 = vadd.f32 %v575, 1e-05
      %v577 = vrsqrt.pop %v576
      %578 = vxpose.xlu0.b32.start [1/16] %v470, 128
      %579 = vxpose.xlu0.b32.cont [2/16] 0.0, 128
      %580 = vxpose.xlu0.b32.cont [3/16] 0.0, 128
      %581 = vxpose.xlu0.b32.cont [4/16] 0.0, 128
      %582 = vxpose.xlu0.b32.cont [5/16] 0.0, 128
      %583 = vxpose.xlu0.b32.cont [6/16] 0.0, 128
      %584 = vxpose.xlu0.b32.cont [7/16] 0.0, 128
      %585 = vxpose.xlu0.b32.cont [8/16] 0.0, 128
      %586 = vxpose.xlu0.b32.cont [9/16] 0.0, 128
      %587 = vxpose.xlu0.b32.cont [10/16] 0.0, 128
      %588 = vxpose.xlu0.b32.cont [11/16] 0.0, 128
      %589 = vxpose.xlu0.b32.cont [12/16] 0.0, 128
      %590 = vxpose.xlu0.b32.cont [13/16] 0.0, 128
      %591 = vxpose.xlu0.b32.cont [14/16] 0.0, 128
      %592 = vxpose.xlu0.b32.cont [15/16] 0.0, 128
      %593 = vxpose.xlu0.b32.end [16/16] 0.0, 128
      %v594 = vpop.trf.xlu0
      %v595 = vpop.trf.xlu0
      %v596 = vpop.trf.xlu0
      %v597 = vpop.trf.xlu0
      %v598 = vpop.trf.xlu0
      %v599 = vpop.trf.xlu0
      %v600 = vpop.trf.xlu0
      %v601 = vpop.trf.xlu0
      %v602 = vpop.trf.xlu0
      %v603 = vpop.trf.xlu0
      %v604 = vpop.trf.xlu0
      %v605 = vpop.trf.xlu0
      %v606 = vpop.trf.xlu0
      %v607 = vpop.trf.xlu0
      %v608 = vpop.trf.xlu0
      %v609 = vpop.trf.xlu0
      %v610 = vmul.f32 %v594, %v577
      %611 = vxpose.xlu0.b32.start [1/16] %v542, 128
      %612 = vxpose.xlu0.b32.cont [2/16] 0.0, 128
      %613 = vxpose.xlu0.b32.cont [3/16] 0.0, 128
      %614 = vxpose.xlu0.b32.cont [4/16] 0.0, 128
      %615 = vxpose.xlu0.b32.cont [5/16] 0.0, 128
      %616 = vxpose.xlu0.b32.cont [6/16] 0.0, 128
      %617 = vxpose.xlu0.b32.cont [7/16] 0.0, 128
      %618 = vxpose.xlu0.b32.cont [8/16] 0.0, 128
      %619 = vxpose.xlu0.b32.cont [9/16] 0.0, 128
      %620 = vxpose.xlu0.b32.cont [10/16] 0.0, 128
      %621 = vxpose.xlu0.b32.cont [11/16] 0.0, 128
      %622 = vxpose.xlu0.b32.cont [12/16] 0.0, 128
      %623 = vxpose.xlu0.b32.cont [13/16] 0.0, 128
      %624 = vxpose.xlu0.b32.cont [14/16] 0.0, 128
      %625 = vxpose.xlu0.b32.cont [15/16] 0.0, 128
      %626 = vxpose.xlu0.b32.end [16/16] 0.0, 128
      %v627 = vpop.trf.xlu0
      %v628 = vpop.trf.xlu0
      %v629 = vpop.trf.xlu0
      %v630 = vpop.trf.xlu0
      %v631 = vpop.trf.xlu0
      %v632 = vpop.trf.xlu0
      %v633 = vpop.trf.xlu0
      %v634 = vpop.trf.xlu0
      %v635 = vpop.trf.xlu0
      %v636 = vpop.trf.xlu0
      %v637 = vpop.trf.xlu0
      %v638 = vpop.trf.xlu0
      %v639 = vpop.trf.xlu0
      %v640 = vpop.trf.xlu0
      %v641 = vpop.trf.xlu0
      %v642 = vpop.trf.xlu0
      %644 = vset.pattern.permute.xlu0 0
      %645 = vperm.xlu0 %644, %v610
      %v646 = vpop.permute.xlu0 %645
      %v649 = vcombine.high %v565, %v565
      %v651 = vmul.f32 %v646, %v565
      %v652 = vmul.f32 %v646, %v649
      %654 = vset.pattern.permute.xlu0 0
      %655 = vperm.xlu0 %654, %v627
      %v656 = vpop.permute.xlu0 %655
      %v658 = vadd.f32 %v651, %v656
      %v659 = vadd.f32 %v652, %v656
      %v662 = vcombine.low %v658, %v659
      %664 = vst [vmem:[%s319] sm:$0xff] %v662
      %p665 = scmp.lt.s32.totalorder %s19, 1
      %s666 = scalar_select %p665, %s19, 1
      %s667 = smul.addr %s666, 2
      %s668 = smul.addr %s667, 4
      %s669 = scalar_lea.vmem %s8, %s668
      // Predicated region
      $region53: #{adain.1} parent=51 // pred_check
        %p670 = pneg %p215
      $region54: #{adain.1} parent=51 // pred_check_branch
        %672 = sbr.rel (%p670) target = $region56
      $region55: #{adain.1} parent=51 // pred_region
        _
      $region56: #{adain.1} parent=51 // pred_fallthru
        _
    $region52: #{adain.1} parent=5 // pred_fallthru
      _
    %p673 = scmp.le.s32.totalorder 2, %s14
    // Predicated region
    $region57: #{adain.1} parent=5 // pred_check
      %p674 = pneg %p673
    $region58: #{adain.1} parent=5 // pred_check_branch
      %676 = sbr.rel (%p674) target = $region60
    $region59: #{adain.1} parent=5 // pred_region
      %s677 = ssub.s32 %s14, 2
      // Predicated region
      $region61: #{adain.1} parent=59 // pred_check
        %p678 = pneg %p221
      $region62: #{adain.1} parent=59 // pred_check_branch
        %680 = sbr.rel (%p678) target = $region64
      $region63: #{adain.1} parent=59 // pred_region
        %p681 = scmp.lt.s32.totalorder %s20, 1
        %s682 = scalar_select %p681, %s20, 1
        %s683 = smul.addr %s682, 2
        %s684 = smul.addr %s683, 4
        %s685 = scalar_lea.vmem %s8, %s684
      $region64: #{adain.1} parent=59 // pred_fallthru
        _
    $region60: #{adain.1} parent=5 // pred_fallthru
      _
  $region6: #{adain.1} parent=0 // loop_footer
    %s18 = sadd.s32 1, %s14
  $region7: #{adain.1} parent=0 // loop_footer_branch
    %13 = sbr.rel target = $region3
  $region8: #{adain.1} parent=0 // loop_exit
    _

</llo_original>
